<compile_context>
chip_gen: v5e
topology: v5e:2x2
jax: 0.10.0
libtpu: 0.0.40
codegen_flags: <defaults>
</compile_context>

<pallas_src>
import jax
import jax.numpy as jnp
from jax import lax
from jax.experimental import pallas as pl
from jax.experimental.pallas import tpu as pltpu


def _make_kernel(NB, Hi, Ho, Wo, Cin, Cout, Cout_pad, compute_dtype):
    M = NB * Ho * Wo
    K = 9 * Cin

    def kernel(x_ref, scale_ref, shift_ref, colmask_ref, rowmask_ref, w_ref, out_ref):
        # x block: (NB, Hi, 2, Wo+1, 2*Cin)
        #   dim1 = output-row index i (padded row r = 2*i + q), dim2 = row phase q,
        #   dim3 = output-col index j (padded col c = 2*j + p), dim4 = p*Cin + channel.
        x = x_ref[...]

        # Eval-mode BatchNorm (folded to scale/shift) + ReLU, applied once per input element.
        a = jnp.maximum(x * scale_ref[...] + shift_ref[...], 0.0)
        # Zero the spatial zero-padding (needed because ReLU(shift) != 0 on padded pixels):
        # two small broadcast multiplies instead of full-slab iota/compare passes.
        a = a * colmask_ref[...] * rowmask_ref[...]
        a = a.astype(compute_dtype)                       # bf16 operands for the MXU (last op)

        # Per-ky row slabs; each image's own bottom halo row is inside the block.
        a0 = a[:, 0:Ho, 0]                                # ky=0 : padded row 2i     (NB,Ho,Wo+1,2Cin)
        a1 = a[:, 0:Ho, 1]                                # ky=1 : padded row 2i+1
        a2 = a[:, 1:Hi, 0]                                # ky=2 : padded row 2i+2
        # im2col along the lane axis: per ky, [kx=0,1] then [kx=2] -> lane order (ky, kx, cin),
        # matching the HWIO reshape of the conv weights.
        pieces = []
        for s in (a0, a1, a2):
            pieces.append(s[:, :, 0:Wo, :])               # kx=0,1 (2*Cin lanes)
            pieces.append(s[:, :, 1:Wo + 1, 0:Cin])       # kx=2   (Cin lanes)
        col = jnp.concatenate(pieces, axis=-1)            # (NB, Ho, Wo, 9*Cin)

        # Single MXU dot per grid step, f32 accumulation.
        acc = jnp.dot(col.reshape(M, K), w_ref[...],
                      preferred_element_type=jnp.float32)  # (M, Cout_pad)

        # Store unpadded channels -> no 16x output write amplification in HBM.
        out_ref[...] = acc[:, 0:Cout].reshape(NB, Ho, Wo, Cout).astype(out_ref.dtype)

    return kernel


def _pick_batch_per_step(N, Hi, Ho, Wo, Cin, Cout_pad,
                         target_m=2048, vmem_budget_bytes=8 << 20):
    """Pick NB (whole images per grid step) so NB*Ho*Wo ~ target_m within a VMEM budget.

    The budget is conservative (<= v5e's 16 MiB scoped-VMEM default and v7x's smaller VMEM)."""
    def rup(v, m):
        return -(-v // m) * m

    m_img = Ho * Wo
    in_img = Hi * 2 * (Wo + 1) * 2 * Cin * 4              # f32 input block, per image
    out_img = Ho * rup(Wo, 8) * 128 * 4                   # VMEM out block (lane-padded), per image
    per_img = (2 * in_img                                  # double-buffered input
               + 2 * out_img                               # double-buffered output
               + in_img + in_img // 2                      # f32 + bf16 activation copies
               + m_img * 9 * Cin * 2                       # bf16 im2col
               + m_img * Cout_pad * 4)                     # f32 dot accumulator
    nb = max(1, min(N,
                    max(1, target_m // max(1, m_img)),
                    max(1, vmem_budget_bytes // max(1, per_img))))
    # v7x megacore: prefer >=2 "parallel" grid steps when each step still has enough work.
    if N >= 2 and pl.cdiv(N, nb) == 1 and ((N + 1) // 2) * m_img >= 512:
        nb = (N + 1) // 2
    return nb


def downsample_forward(x_nchw, gamma, beta, running_mean, running_var, conv_w,
                       eps=1e-5, batch_per_step=None, compute_dtype=jnp.bfloat16,
                       out_layout="NCHW", out_dtype=jnp.float32):
    """x_nchw: (N, Cin, H, W) f32.  conv_w: (Cout, Cin, 3, 3).  Returns (N, Cout, Ho, Wo)."""
    N, Cin, H, W = x_nchw.shape
    Cout = conv_w.shape[0]
    Ho = (H - 1) // 2 + 1
    Wo = (W - 1) // 2 + 1
    Hi = Ho + 1                                            # per-image i-rows incl. bottom halo
    Cout_pad = ((Cout + 127) // 128) * 128                 # MXU N-dim padding (sliced in-kernel)

    if batch_per_step is None:
        NB = _pick_batch_per_step(N, Hi, Ho, Wo, Cin, Cout_pad)
    else:
        NB = max(1, min(int(batch_per_step), N))
    n_steps = pl.cdiv(N, NB)
    N_pad = n_steps * NB

    # ---- BN folded to scale/shift (no division-by-scale hazard) ----
    scale = gamma / jnp.sqrt(running_var + eps)
    shift = beta - running_mean * scale
    scale2 = jnp.tile(scale, 2).reshape(1, 2 * Cin)        # lane index m = p*Cin + channel
    shift2 = jnp.tile(shift, 2).reshape(1, 2 * Cin)

    # column validity mask over (j, p*Cin+ch): padded col c = 2j+p is real iff 1 <= c <= W
    j_idx = jnp.arange(Wo + 1, dtype=jnp.int32)[:, None]
    p_idx = jnp.arange(2 * Cin, dtype=jnp.int32)[None, :] // Cin
    c_idx = 2 * j_idx + p_idx
    col_mask = ((c_idx >= 1) & (c_idx <= W)).astype(jnp.float32)        # (Wo+1, 2*Cin)

    # row validity mask over (i, q): padded row r = 2i+q is real iff 1 <= r <= H
    i_idx = jnp.arange(Hi, dtype=jnp.int32)[:, None]
    q_idx = jnp.arange(2, dtype=jnp.int32)[None, :]
    r_idx = 2 * i_idx + q_idx
    row_valid = ((r_idx >= 1) & (r_idx <= H)).astype(jnp.float32)       # (Hi, 2)
    row_mask = jnp.broadcast_to(row_valid[:, :, None, None], (Hi, 2, 1, 2 * Cin))

    # weights: (Cout, Cin, 3, 3) -> HWIO -> (9*Cin, Cout_pad), bf16; lane order (ky, kx, cin)
    w_hwio = jnp.transpose(conv_w, (2, 3, 1, 0))                        # (3, 3, Cin, Cout)
    w_hwio = jnp.pad(w_hwio, ((0, 0), (0, 0), (0, 0), (0, Cout_pad - Cout)))
    w_mat = w_hwio.reshape(9 * Cin, Cout_pad).astype(compute_dtype)

    # ---- input: NHWC, single zero-pad (+ batch pad), then a free row-major phase split ----
    x = jnp.transpose(x_nchw, (0, 2, 3, 1))
    Hp, Wp = 2 * Hi, 2 * (Wo + 1)
    xp = jnp.pad(x, ((0, N_pad - N), (1, Hp - H - 1), (1, Wp - W - 1), (0, 0)))
    xr = xp.reshape(N_pad, Hi, 2, Wo + 1, 2 * Cin)         # (n, i, q, j, p*Cin+ch)

    kernel = _make_kernel(NB, Hi, Ho, Wo, Cin, Cout, Cout_pad, compute_dtype)

    out = pl.pallas_call(
        kernel,
        out_shape=jax.ShapeDtypeStruct((N_pad, Ho, Wo, Cout), out_dtype),
        grid_spec=pltpu.PrefetchScalarGridSpec(
            num_scalar_prefetch=0,
            grid=(n_steps,),
            in_specs=[
                pl.BlockSpec((NB, Hi, 2, Wo + 1, 2 * Cin), lambda s: (s, 0, 0, 0, 0)),
                pl.BlockSpec((1, 2 * Cin), lambda s: (0, 0)),
                pl.BlockSpec((1, 2 * Cin), lambda s: (0, 0)),
                pl.BlockSpec((Wo + 1, 2 * Cin), lambda s: (0, 0)),
                pl.BlockSpec((Hi, 2, 1, 2 * Cin), lambda s: (0, 0, 0, 0)),
                pl.BlockSpec((9 * Cin, Cout_pad), lambda s: (0, 0)),
            ],
            out_specs=pl.BlockSpec((NB, Ho, Wo, Cout), lambda s: (s, 0, 0, 0)),
        ),
        compiler_params=pltpu.CompilerParams(dimension_semantics=("parallel",)),
    )(xr, scale2, shift2, col_mask, row_mask, w_mat)

    if N_pad != N:
        out = out[:N]
    if out_layout == "NHWC":
        return out                                         # skip the final transpose if possible
    # True-size (unpadded-channel) transpose only -- no pass over a Cout_pad-inflated tensor.
    return jnp.transpose(out, (0, 3, 1, 2))                # NCHW, matching the PyTorch module


def _reference(x_nchw, gamma, beta, running_mean, running_var, conv_w, eps=1e-5,
               compute_dtype=None):
    """Pure-JAX reference (eval-mode BN).  If compute_dtype is given, the conv operands are
    cast to it (mirroring the kernel's MXU dtype) while accumulating in f32."""
    x = jnp.transpose(x_nchw, (0, 2, 3, 1))
    scale = gamma / jnp.sqrt(running_var + eps)
    shift = beta - running_mean * scale
    a = jnp.maximum(x * scale + shift, 0.0)
    w_hwio = jnp.transpose(conv_w, (2, 3, 1, 0))
    if compute_dtype is not None:
        a = a.astype(compute_dtype)
        w_hwio = w_hwio.astype(compute_dtype)
    y = lax.conv_general_dilated(a, w_hwio, window_strides=(2, 2),
                                 padding=((1, 1), (1, 1)),
                                 dimension_numbers=("NHWC", "HWIO", "NHWC"),
                                 preferred_element_type=jnp.float32)
    return jnp.transpose(y, (0, 3, 1, 2))


def _run_case(key, N, Cin, H, W, Cout, batch_per_step=None):
    k_x, k_g, k_b, k_m, k_v, k_w = jax.random.split(key, 6)
    x = jax.random.normal(k_x, (N, Cin, H, W), dtype=jnp.float32)
    gamma = jax.random.uniform(k_g, (Cin,), jnp.float32, 0.5, 1.5)
    beta = 0.1 * jax.random.normal(k_b, (Cin,), jnp.float32)
    running_mean = 0.1 * jax.random.normal(k_m, (Cin,), jnp.float32)
    running_var = jax.random.uniform(k_v, (Cin,), jnp.float32, 0.5, 1.5)
    conv_w = jax.random.normal(k_w, (Cout, Cin, 3, 3), jnp.float32) / jnp.sqrt(9.0 * Cin)

    y = downsample_forward(x, gamma, beta, running_mean, running_var, conv_w,
                           batch_per_step=batch_per_step)
    y = jax.block_until_ready(y)

    Ho, Wo = (H - 1) // 2 + 1, (W - 1) // 2 + 1
    assert y.shape == (N, Cout, Ho, Wo), y.shape

    # Tight check vs a reference using the same compute dtype (bf16 operands, f32 accumulate).
    y_ref_bf16 = _reference(x, gamma, beta, running_mean, running_var, conv_w,
                            compute_dtype=jnp.bfloat16)
    err_b = float(jnp.max(jnp.abs(y - y_ref_bf16)))
    assert jnp.allclose(y, y_ref_bf16, rtol=2e-3, atol=2e-3), err_b

    # Loose sanity check vs the exact f32 reference (difference = bf16 operand rounding only).
    y_ref_f32 = _reference(x, gamma, beta, running_mean, running_var, conv_w)
    err_f = float(jnp.max(jnp.abs(y - y_ref_f32)))
    assert jnp.allclose(y, y_ref_f32, rtol=5e-2, atol=5e-2), err_f


if __name__ == "__main__":
    key = jax.random.PRNGKey(0)
    k1, k2, k3 = jax.random.split(key, 3)
    # Main config consistent with the module at small scale: batch=2, Cin=4, 16x16 -> Cout=8.
    _run_case(k1, N=2, Cin=4, H=16, W=16, Cout=8)                        # NB=2, single grid step
    _run_case(k2, N=2, Cin=4, H=16, W=16, Cout=8, batch_per_step=1)      # multi-step grid path
    _run_case(k3, N=3, Cin=3, H=13, W=11, Cout=6, batch_per_step=2)      # batch padding + odd dims
    print("KERNEL_OK")
</pallas_src>

<mosaic_0001>
module attributes {stable_mosaic.version = 11 : i64} {
  func.func @kernel(%arg0: i32, %arg1: memref<2x9x2x9x8xf32, #tpu.memory_space<vmem>>, %arg2: memref<1x8xf32, #tpu.memory_space<vmem>>, %arg3: memref<1x8xf32, #tpu.memory_space<vmem>>, %arg4: memref<9x8xf32, #tpu.memory_space<vmem>>, %arg5: memref<9x2x1x8xf32, #tpu.memory_space<vmem>>, %arg6: memref<36x128xbf16, #tpu.memory_space<vmem>>, %arg7: memref<2x8x8x8xf32, #tpu.memory_space<vmem>>) attributes {dimension_semantics = [#tpu.dimension_semantics<parallel>], iteration_bounds = array<i64: 1>, scalar_prefetch = 0 : i64, scratch_operands = 0 : i64, tpu.core_type = #tpu.core_type<tc>, window_params = [{transform_indices = @transform_0, window_bounds = array<i64: 2, 9, 2, 9, 8>}, {pipeline_mode = #tpu.pipeline_mode<synchronous>, transform_indices = @transform_1, window_bounds = array<i64: 1, 8>}, {pipeline_mode = #tpu.pipeline_mode<synchronous>, transform_indices = @transform_2, window_bounds = array<i64: 1, 8>}, {pipeline_mode = #tpu.pipeline_mode<synchronous>, transform_indices = @transform_3, window_bounds = array<i64: 9, 8>}, {pipeline_mode = #tpu.pipeline_mode<synchronous>, transform_indices = @transform_4, window_bounds = array<i64: 9, 2, 1, 8>}, {pipeline_mode = #tpu.pipeline_mode<synchronous>, transform_indices = @transform_5, window_bounds = array<i64: 36, 128>}, {transform_indices = @transform_6, window_bounds = array<i64: 2, 8, 8, 8>}]} {
    %c0 = arith.constant 0 : index
    %c0_0 = arith.constant 0 : index
    %c0_1 = arith.constant 0 : index
    %c0_2 = arith.constant 0 : index
    %c0_3 = arith.constant 0 : index
    %0 = vector.load %arg1[%c0, %c0_0, %c0_1, %c0_2, %c0_3] : memref<2x9x2x9x8xf32, #tpu.memory_space<vmem>>, vector<2x9x2x9x8xf32>
    %c0_4 = arith.constant 0 : index
    %c0_5 = arith.constant 0 : index
    %1 = vector.load %arg2[%c0_4, %c0_5] : memref<1x8xf32, #tpu.memory_space<vmem>>, vector<1x8xf32>
    %2 = vector.shape_cast %1 : vector<1x8xf32> to vector<1x1x1x1x8xf32>
    %3 = vector.broadcast %2 : vector<1x1x1x1x8xf32> to vector<2x9x2x9x8xf32>
    %4 = arith.mulf %0, %3 : vector<2x9x2x9x8xf32>
    %c0_6 = arith.constant 0 : index
    %c0_7 = arith.constant 0 : index
    %5 = vector.load %arg3[%c0_6, %c0_7] : memref<1x8xf32, #tpu.memory_space<vmem>>, vector<1x8xf32>
    %6 = vector.shape_cast %5 : vector<1x8xf32> to vector<1x1x1x1x8xf32>
    %7 = vector.broadcast %6 : vector<1x1x1x1x8xf32> to vector<2x9x2x9x8xf32>
    %8 = arith.addf %4, %7 : vector<2x9x2x9x8xf32>
    %cst = arith.constant 0.000000e+00 : f32
    %9 = vector.broadcast %cst : f32 to vector<2x9x2x9x8xf32>
    %10 = arith.maximumf %8, %9 : vector<2x9x2x9x8xf32>
    %c0_8 = arith.constant 0 : index
    %c0_9 = arith.constant 0 : index
    %11 = vector.load %arg4[%c0_8, %c0_9] : memref<9x8xf32, #tpu.memory_space<vmem>>, vector<9x8xf32>
    %12 = vector.shape_cast %11 : vector<9x8xf32> to vector<1x1x1x9x8xf32>
    %13 = vector.broadcast %12 : vector<1x1x1x9x8xf32> to vector<2x9x2x9x8xf32>
    %14 = arith.mulf %10, %13 : vector<2x9x2x9x8xf32>
    %c0_10 = arith.constant 0 : index
    %c0_11 = arith.constant 0 : index
    %c0_12 = arith.constant 0 : index
    %c0_13 = arith.constant 0 : index
    %15 = vector.load %arg5[%c0_10, %c0_11, %c0_12, %c0_13] : memref<9x2x1x8xf32, #tpu.memory_space<vmem>>, vector<9x2x1x8xf32>
    %16 = vector.shape_cast %15 : vector<9x2x1x8xf32> to vector<1x9x2x1x8xf32>
    %17 = vector.broadcast %16 : vector<1x9x2x1x8xf32> to vector<2x9x2x9x8xf32>
    %18 = arith.mulf %14, %17 : vector<2x9x2x9x8xf32>
    %19 = arith.truncf %18 : vector<2x9x2x9x8xf32> to vector<2x9x2x9x8xbf16>
    %20 = vector.extract_strided_slice %19 {offsets = [0, 0, 0, 0, 0], sizes = [2, 8, 1, 9, 8], strides = [1, 1, 1, 1, 1]} : vector<2x9x2x9x8xbf16> to vector<2x8x1x9x8xbf16>
    %21 = vector.shape_cast %20 : vector<2x8x1x9x8xbf16> to vector<2x8x9x8xbf16>
    %22 = vector.extract_strided_slice %19 {offsets = [0, 0, 1, 0, 0], sizes = [2, 8, 1, 9, 8], strides = [1, 1, 1, 1, 1]} : vector<2x9x2x9x8xbf16> to vector<2x8x1x9x8xbf16>
    %23 = vector.shape_cast %22 : vector<2x8x1x9x8xbf16> to vector<2x8x9x8xbf16>
    %24 = vector.extract_strided_slice %19 {offsets = [0, 1, 0, 0, 0], sizes = [2, 8, 1, 9, 8], strides = [1, 1, 1, 1, 1]} : vector<2x9x2x9x8xbf16> to vector<2x8x1x9x8xbf16>
    %25 = vector.shape_cast %24 : vector<2x8x1x9x8xbf16> to vector<2x8x9x8xbf16>
    %26 = vector.extract_strided_slice %21 {offsets = [0, 0, 0, 0], sizes = [2, 8, 8, 8], strides = [1, 1, 1, 1]} : vector<2x8x9x8xbf16> to vector<2x8x8x8xbf16>
    %27 = vector.extract_strided_slice %21 {offsets = [0, 0, 1, 0], sizes = [2, 8, 8, 4], strides = [1, 1, 1, 1]} : vector<2x8x9x8xbf16> to vector<2x8x8x4xbf16>
    %28 = vector.extract_strided_slice %23 {offsets = [0, 0, 0, 0], sizes = [2, 8, 8, 8], strides = [1, 1, 1, 1]} : vector<2x8x9x8xbf16> to vector<2x8x8x8xbf16>
    %29 = vector.extract_strided_slice %23 {offsets = [0, 0, 1, 0], sizes = [2, 8, 8, 4], strides = [1, 1, 1, 1]} : vector<2x8x9x8xbf16> to vector<2x8x8x4xbf16>
    %30 = vector.extract_strided_slice %25 {offsets = [0, 0, 0, 0], sizes = [2, 8, 8, 8], strides = [1, 1, 1, 1]} : vector<2x8x9x8xbf16> to vector<2x8x8x8xbf16>
    %31 = vector.extract_strided_slice %25 {offsets = [0, 0, 1, 0], sizes = [2, 8, 8, 4], strides = [1, 1, 1, 1]} : vector<2x8x9x8xbf16> to vector<2x8x8x4xbf16>
    %32 = tpu.concatenate %26, %27, %28, %29, %30, %31 in 3 : vector<2x8x8x8xbf16>, vector<2x8x8x4xbf16>, vector<2x8x8x8xbf16>, vector<2x8x8x4xbf16>, vector<2x8x8x8xbf16>, vector<2x8x8x4xbf16> -> vector<2x8x8x36xbf16>
    %33 = vector.shape_cast %32 : vector<2x8x8x36xbf16> to vector<128x36xbf16>
    %c0_14 = arith.constant 0 : index
    %c0_15 = arith.constant 0 : index
    %34 = vector.load %arg6[%c0_14, %c0_15] : memref<36x128xbf16, #tpu.memory_space<vmem>>, vector<36x128xbf16>
    %cst_16 = arith.constant dense<0.000000e+00> : vector<128x128xf32>
    %35 = tpu.matmul %33, %34, %cst_16 {dimension_numbers = #tpu.dot_dimension_numbers<[1], [0], [0], [1], [0, 0, 1, 1], [], []>} : vector<128x36xbf16>, vector<36x128xbf16>, vector<128x128xf32> -> vector<128x128xf32>
    %36 = vector.extract_strided_slice %35 {offsets = [0, 0], sizes = [128, 8], strides = [1, 1]} : vector<128x128xf32> to vector<128x8xf32>
    %37 = vector.shape_cast %36 : vector<128x8xf32> to vector<2x8x8x8xf32>
    %c0_17 = arith.constant 0 : index
    %c0_18 = arith.constant 0 : index
    %c0_19 = arith.constant 0 : index
    %c0_20 = arith.constant 0 : index
    %38 = vector.load %arg7[%c0_17, %c0_18, %c0_19, %c0_20] : memref<2x8x8x8xf32, #tpu.memory_space<vmem>>, vector<2x8x8x8xf32>
    tpu.vector_store %arg7[%c0_17, %c0_18, %c0_19, %c0_20], %37 {strides = array<i32>} : memref<2x8x8x8xf32, #tpu.memory_space<vmem>>, vector<2x8x8x8xf32>,
    return
  }
  func.func @transform_0(%arg0: i32) -> (i32, i32, i32, i32, i32) {
    %c0_i32 = arith.constant 0 : i32
    %c0_i32_0 = arith.constant 0 : i32
    %c0_i32_1 = arith.constant 0 : i32
    %c0_i32_2 = arith.constant 0 : i32
    %c0_i32_3 = arith.constant 0 : i32
    return %arg0, %c0_i32, %c0_i32_0, %c0_i32_1, %c0_i32_2 : i32, i32, i32, i32, i32
  }
  func.func @transform_1(%arg0: i32) -> (i32, i32) {
    %c0_i32 = arith.constant 0 : i32
    %c0_i32_0 = arith.constant 0 : i32
    %c0_i32_1 = arith.constant 0 : i32
    return %c0_i32, %c0_i32_0 : i32, i32
  }
  func.func @transform_2(%arg0: i32) -> (i32, i32) {
    %c0_i32 = arith.constant 0 : i32
    %c0_i32_0 = arith.constant 0 : i32
    %c0_i32_1 = arith.constant 0 : i32
    return %c0_i32, %c0_i32_0 : i32, i32
  }
  func.func @transform_3(%arg0: i32) -> (i32, i32) {
    %c0_i32 = arith.constant 0 : i32
    %c0_i32_0 = arith.constant 0 : i32
    %c0_i32_1 = arith.constant 0 : i32
    return %c0_i32, %c0_i32_0 : i32, i32
  }
  func.func @transform_4(%arg0: i32) -> (i32, i32, i32, i32) {
    %c0_i32 = arith.constant 0 : i32
    %c0_i32_0 = arith.constant 0 : i32
    %c0_i32_1 = arith.constant 0 : i32
    %c0_i32_2 = arith.constant 0 : i32
    %c0_i32_3 = arith.constant 0 : i32
    return %c0_i32, %c0_i32_0, %c0_i32_1, %c0_i32_2 : i32, i32, i32, i32
  }
  func.func @transform_5(%arg0: i32) -> (i32, i32) {
    %c0_i32 = arith.constant 0 : i32
    %c0_i32_0 = arith.constant 0 : i32
    %c0_i32_1 = arith.constant 0 : i32
    return %c0_i32, %c0_i32_0 : i32, i32
  }
  func.func @transform_6(%arg0: i32) -> (i32, i32, i32, i32) {
    %c0_i32 = arith.constant 0 : i32
    %c0_i32_0 = arith.constant 0 : i32
    %c0_i32_1 = arith.constant 0 : i32
    %c0_i32_2 = arith.constant 0 : i32
    return %arg0, %c0_i32, %c0_i32_0, %c0_i32_1 : i32, i32, i32, i32
  }
}

</mosaic_0001>

<llo_original>
// kernel: tpu_custom_call.1
$region0: #{tpu_custom_call.1}
  #allocation0 [shape = 'u32[]', space=smem, size = 0x4, offset = 0x4, fixed_abs, tag = 'smem constant byte address 0x4 - core index']
  #allocation1 [shape = 'u32[72,128]{1,0:T(1,128)}', space=vmem, size = 0x9000, scoped, tag = 'internal scratch']
  %s0 = inlined_call_operand.vmem [shape: f32[2,9,2,9,8], index: 0, kind: input, shape index: {}]
  %s1 = inlined_call_operand.vmem [shape: f32[1,8], index: 1, kind: input, shape index: {}]
  %s2 = inlined_call_operand.vmem [shape: f32[1,8], index: 2, kind: input, shape index: {}]
  %s3 = inlined_call_operand.vmem [shape: f32[9,8], index: 3, kind: input, shape index: {}]
  %s4 = inlined_call_operand.vmem [shape: f32[9,2,1,8], index: 4, kind: input, shape index: {}]
  %s5 = inlined_call_operand.vmem [shape: bf16[36,128], index: 5, kind: input, shape index: {}]
  %s6 = inlined_call_operand.hbm [shape: f32[2,8,8,8], index: 6, kind: output, shape index: {}]
  %s7 = sld [smem:[#allocation0]]
  $region34: #{tpu_custom_call.1} parent=0
    _
  %s9 = ssub.s32 1, %s7
  %s10 = scalar_select 0, %s9, %s7
  $region1: #{tpu_custom_call.1} parent=0
    #allocation2 [shape = 'u8[65536]{0}', space=vmem, size = 0x10000, scoped, tag = 'output window, operand 0, single buffered']
    #allocation3 [shape = 's32[1]{0}', space=sflag, size = 0x4, scoped, tag = 'scoped memory for tpu_custom_call.1']
    %11 = vsyncpa [#allocation3], 0
    // Predicated region
    $region2: #{tpu_custom_call.1} parent=1 // pred_check
      _
    $region3: #{tpu_custom_call.1} parent=1 // pred_check_branch
      %13 = sbr.rel (0) target = $region5
    $region4: #{tpu_custom_call.1} parent=1 // pred_region
      _
    $region5: #{tpu_custom_call.1} parent=1 // pred_fallthru
      _
    // Predicated region
    $region6: #{tpu_custom_call.1} parent=1 // pred_check
      _
    $region7: #{tpu_custom_call.1} parent=1 // pred_check_branch
      %15 = sbr.rel (0) target = $region9
    $region8: #{tpu_custom_call.1} parent=1 // pred_region
      _
    $region9: #{tpu_custom_call.1} parent=1 // pred_fallthru
      _
    // Predicated region
    $region10: #{tpu_custom_call.1} parent=1 // pred_check
      _
    $region11: #{tpu_custom_call.1} parent=1 // pred_check_branch
      %17 = sbr.rel (0) target = $region13
    $region12: #{tpu_custom_call.1} parent=1 // pred_region
      _
    $region13: #{tpu_custom_call.1} parent=1 // pred_fallthru
      _
    // Predicated region
    $region14: #{tpu_custom_call.1} parent=1 // pred_check
      _
    $region15: #{tpu_custom_call.1} parent=1 // pred_check_branch
      %19 = sbr.rel (0) target = $region17
    $region16: #{tpu_custom_call.1} parent=1 // pred_region
      _
    $region17: #{tpu_custom_call.1} parent=1 // pred_fallthru
      _
    // Predicated region
    $region18: #{tpu_custom_call.1} parent=1 // pred_check
      _
    $region19: #{tpu_custom_call.1} parent=1 // pred_check_branch
      %21 = sbr.rel (0) target = $region21
    $region20: #{tpu_custom_call.1} parent=1 // pred_region
      _
    $region21: #{tpu_custom_call.1} parent=1 // pred_fallthru
      _
    // Predicated region
    $region22: #{tpu_custom_call.1} parent=1 // pred_check
      _
    $region23: #{tpu_custom_call.1} parent=1 // pred_check_branch
      %23 = sbr.rel (0) target = $region25
    $region24: #{tpu_custom_call.1} parent=1 // pred_region
      _
    $region25: #{tpu_custom_call.1} parent=1 // pred_fallthru
      _
    %v25 = vld [vmem:[%s0] sm:$0xff]
    %v26 = vld [vmem:[%s0 + $0x8] sm:$0x1]
    %v27 = vld [vmem:[%s0 + $0x10] sm:$0xff]
    %v28 = vld [vmem:[%s0 + $0x18] sm:$0x1]
    %v29 = vld [vmem:[%s0 + $0x20] sm:$0xff]
    %v30 = vld [vmem:[%s0 + $0x28] sm:$0x1]
    %v31 = vld [vmem:[%s0 + $0x30] sm:$0xff]
    %v32 = vld [vmem:[%s0 + $0x38] sm:$0x1]
    %v33 = vld [vmem:[%s0 + $0x40] sm:$0xff]
    %v34 = vld [vmem:[%s0 + $0x48] sm:$0x1]
    %v35 = vld [vmem:[%s0 + $0x50] sm:$0xff]
    %v36 = vld [vmem:[%s0 + $0x58] sm:$0x1]
    %v37 = vld [vmem:[%s0 + $0x60] sm:$0xff]
    %v38 = vld [vmem:[%s0 + $0x68] sm:$0x1]
    %v39 = vld [vmem:[%s0 + $0x70] sm:$0xff]
    %v40 = vld [vmem:[%s0 + $0x78] sm:$0x1]
    %v41 = vld [vmem:[%s0 + $0x80] sm:$0xff]
    %v42 = vld [vmem:[%s0 + $0x88] sm:$0x1]
    %v43 = vld [vmem:[%s0 + $0x90] sm:$0xff]
    %v44 = vld [vmem:[%s0 + $0x98] sm:$0x1]
    %v45 = vld [vmem:[%s0 + $0xa0] sm:$0xff]
    %v46 = vld [vmem:[%s0 + $0xa8] sm:$0x1]
    %v47 = vld [vmem:[%s0 + $0xb0] sm:$0xff]
    %v48 = vld [vmem:[%s0 + $0xb8] sm:$0x1]
    %v49 = vld [vmem:[%s0 + $0xc0] sm:$0xff]
    %v50 = vld [vmem:[%s0 + $0xc8] sm:$0x1]
    %v51 = vld [vmem:[%s0 + $0xd0] sm:$0xff]
    %v52 = vld [vmem:[%s0 + $0xd8] sm:$0x1]
    %v53 = vld [vmem:[%s0 + $0xe0] sm:$0xff]
    %v54 = vld [vmem:[%s0 + $0xe8] sm:$0x1]
    %v55 = vld [vmem:[%s0 + $0xf0] sm:$0xff]
    %v56 = vld [vmem:[%s0 + $0xf8] sm:$0x1]
    %v57 = vld [vmem:[%s0 + $0x100] sm:$0xff]
    %v58 = vld [vmem:[%s0 + $0x108] sm:$0x1]
    %v59 = vld [vmem:[%s0 + $0x120] sm:$0xff]
    %v60 = vld [vmem:[%s0 + $0x128] sm:$0x1]
    %v61 = vld [vmem:[%s0 + $0x130] sm:$0xff]
    %v62 = vld [vmem:[%s0 + $0x138] sm:$0x1]
    %v63 = vld [vmem:[%s0 + $0x140] sm:$0xff]
    %v64 = vld [vmem:[%s0 + $0x148] sm:$0x1]
    %v65 = vld [vmem:[%s0 + $0x150] sm:$0xff]
    %v66 = vld [vmem:[%s0 + $0x158] sm:$0x1]
    %v67 = vld [vmem:[%s0 + $0x160] sm:$0xff]
    %v68 = vld [vmem:[%s0 + $0x168] sm:$0x1]
    %v69 = vld [vmem:[%s0 + $0x170] sm:$0xff]
    %v70 = vld [vmem:[%s0 + $0x178] sm:$0x1]
    %v71 = vld [vmem:[%s0 + $0x180] sm:$0xff]
    %v72 = vld [vmem:[%s0 + $0x188] sm:$0x1]
    %v73 = vld [vmem:[%s0 + $0x190] sm:$0xff]
    %v74 = vld [vmem:[%s0 + $0x198] sm:$0x1]
    %v75 = vld [vmem:[%s0 + $0x1a0] sm:$0xff]
    %v76 = vld [vmem:[%s0 + $0x1a8] sm:$0x1]
    %v77 = vld [vmem:[%s0 + $0x1b0] sm:$0xff]
    %v78 = vld [vmem:[%s0 + $0x1b8] sm:$0x1]
    %v79 = vld [vmem:[%s0 + $0x1c0] sm:$0xff]
    %v80 = vld [vmem:[%s0 + $0x1c8] sm:$0x1]
    %v81 = vld [vmem:[%s0 + $0x1d0] sm:$0xff]
    %v82 = vld [vmem:[%s0 + $0x1d8] sm:$0x1]
    %v83 = vld [vmem:[%s0 + $0x1e0] sm:$0xff]
    %v84 = vld [vmem:[%s0 + $0x1e8] sm:$0x1]
    %v85 = vld [vmem:[%s0 + $0x1f0] sm:$0xff]
    %v86 = vld [vmem:[%s0 + $0x1f8] sm:$0x1]
    %v87 = vld [vmem:[%s0 + $0x200] sm:$0xff]
    %v88 = vld [vmem:[%s0 + $0x208] sm:$0x1]
    %v89 = vld [vmem:[%s0 + $0x210] sm:$0xff]
    %v90 = vld [vmem:[%s0 + $0x218] sm:$0x1]
    %v91 = vld [vmem:[%s0 + $0x220] sm:$0xff]
    %v92 = vld [vmem:[%s0 + $0x228] sm:$0x1]
    %v93 = vld [vmem:[%s1] sm:$0x1]
    %v95 = vperm.slane %v93, 0
    %v97 = vmul.f32 %v25, %v95
    %v98 = vmul.f32 %v26, %v95
    %v99 = vmul.f32 %v27, %v95
    %v100 = vmul.f32 %v28, %v95
    %v101 = vmul.f32 %v29, %v95
    %v102 = vmul.f32 %v30, %v95
    %v103 = vmul.f32 %v31, %v95
    %v104 = vmul.f32 %v32, %v95
    %v105 = vmul.f32 %v33, %v95
    %v106 = vmul.f32 %v34, %v95
    %v107 = vmul.f32 %v35, %v95
    %v108 = vmul.f32 %v36, %v95
    %v109 = vmul.f32 %v37, %v95
    %v110 = vmul.f32 %v38, %v95
    %v111 = vmul.f32 %v39, %v95
    %v112 = vmul.f32 %v40, %v95
    %v113 = vmul.f32 %v41, %v95
    %v114 = vmul.f32 %v42, %v95
    %v115 = vmul.f32 %v43, %v95
    %v116 = vmul.f32 %v44, %v95
    %v117 = vmul.f32 %v45, %v95
    %v118 = vmul.f32 %v46, %v95
    %v119 = vmul.f32 %v47, %v95
    %v120 = vmul.f32 %v48, %v95
    %v121 = vmul.f32 %v49, %v95
    %v122 = vmul.f32 %v50, %v95
    %v123 = vmul.f32 %v51, %v95
    %v124 = vmul.f32 %v52, %v95
    %v125 = vmul.f32 %v53, %v95
    %v126 = vmul.f32 %v54, %v95
    %v127 = vmul.f32 %v55, %v95
    %v128 = vmul.f32 %v56, %v95
    %v129 = vmul.f32 %v57, %v95
    %v130 = vmul.f32 %v58, %v95
    %v131 = vmul.f32 %v59, %v95
    %v132 = vmul.f32 %v60, %v95
    %v133 = vmul.f32 %v61, %v95
    %v134 = vmul.f32 %v62, %v95
    %v135 = vmul.f32 %v63, %v95
    %v136 = vmul.f32 %v64, %v95
    %v137 = vmul.f32 %v65, %v95
    %v138 = vmul.f32 %v66, %v95
    %v139 = vmul.f32 %v67, %v95
    %v140 = vmul.f32 %v68, %v95
    %v141 = vmul.f32 %v69, %v95
    %v142 = vmul.f32 %v70, %v95
    %v143 = vmul.f32 %v71, %v95
    %v144 = vmul.f32 %v72, %v95
    %v145 = vmul.f32 %v73, %v95
    %v146 = vmul.f32 %v74, %v95
    %v147 = vmul.f32 %v75, %v95
    %v148 = vmul.f32 %v76, %v95
    %v149 = vmul.f32 %v77, %v95
    %v150 = vmul.f32 %v78, %v95
    %v151 = vmul.f32 %v79, %v95
    %v152 = vmul.f32 %v80, %v95
    %v153 = vmul.f32 %v81, %v95
    %v154 = vmul.f32 %v82, %v95
    %v155 = vmul.f32 %v83, %v95
    %v156 = vmul.f32 %v84, %v95
    %v157 = vmul.f32 %v85, %v95
    %v158 = vmul.f32 %v86, %v95
    %v159 = vmul.f32 %v87, %v95
    %v160 = vmul.f32 %v88, %v95
    %v161 = vmul.f32 %v89, %v95
    %v162 = vmul.f32 %v90, %v95
    %v163 = vmul.f32 %v91, %v95
    %v164 = vmul.f32 %v92, %v95
    %v165 = vld [vmem:[%s2] sm:$0x1]
    %v167 = vperm.slane %v165, 0
    %v169 = vadd.f32 %v97, %v167
    %v170 = vadd.f32 %v98, %v167
    %v171 = vadd.f32 %v99, %v167
    %v172 = vadd.f32 %v100, %v167
    %v173 = vadd.f32 %v101, %v167
    %v174 = vadd.f32 %v102, %v167
    %v175 = vadd.f32 %v103, %v167
    %v176 = vadd.f32 %v104, %v167
    %v177 = vadd.f32 %v105, %v167
    %v178 = vadd.f32 %v106, %v167
    %v179 = vadd.f32 %v107, %v167
    %v180 = vadd.f32 %v108, %v167
    %v181 = vadd.f32 %v109, %v167
    %v182 = vadd.f32 %v110, %v167
    %v183 = vadd.f32 %v111, %v167
    %v184 = vadd.f32 %v112, %v167
    %v185 = vadd.f32 %v113, %v167
    %v186 = vadd.f32 %v114, %v167
    %v187 = vadd.f32 %v115, %v167
    %v188 = vadd.f32 %v116, %v167
    %v189 = vadd.f32 %v117, %v167
    %v190 = vadd.f32 %v118, %v167
    %v191 = vadd.f32 %v119, %v167
    %v192 = vadd.f32 %v120, %v167
    %v193 = vadd.f32 %v121, %v167
    %v194 = vadd.f32 %v122, %v167
    %v195 = vadd.f32 %v123, %v167
    %v196 = vadd.f32 %v124, %v167
    %v197 = vadd.f32 %v125, %v167
    %v198 = vadd.f32 %v126, %v167
    %v199 = vadd.f32 %v127, %v167
    %v200 = vadd.f32 %v128, %v167
    %v201 = vadd.f32 %v129, %v167
    %v202 = vadd.f32 %v130, %v167
    %v203 = vadd.f32 %v131, %v167
    %v204 = vadd.f32 %v132, %v167
    %v205 = vadd.f32 %v133, %v167
    %v206 = vadd.f32 %v134, %v167
    %v207 = vadd.f32 %v135, %v167
    %v208 = vadd.f32 %v136, %v167
    %v209 = vadd.f32 %v137, %v167
    %v210 = vadd.f32 %v138, %v167
    %v211 = vadd.f32 %v139, %v167
    %v212 = vadd.f32 %v140, %v167
    %v213 = vadd.f32 %v141, %v167
    %v214 = vadd.f32 %v142, %v167
    %v215 = vadd.f32 %v143, %v167
    %v216 = vadd.f32 %v144, %v167
    %v217 = vadd.f32 %v145, %v167
    %v218 = vadd.f32 %v146, %v167
    %v219 = vadd.f32 %v147, %v167
    %v220 = vadd.f32 %v148, %v167
    %v221 = vadd.f32 %v149, %v167
    %v222 = vadd.f32 %v150, %v167
    %v223 = vadd.f32 %v151, %v167
    %v224 = vadd.f32 %v152, %v167
    %v225 = vadd.f32 %v153, %v167
    %v226 = vadd.f32 %v154, %v167
    %v227 = vadd.f32 %v155, %v167
    %v228 = vadd.f32 %v156, %v167
    %v229 = vadd.f32 %v157, %v167
    %v230 = vadd.f32 %v158, %v167
    %v231 = vadd.f32 %v159, %v167
    %v232 = vadd.f32 %v160, %v167
    %v233 = vadd.f32 %v161, %v167
    %v234 = vadd.f32 %v162, %v167
    %v235 = vadd.f32 %v163, %v167
    %v236 = vadd.f32 %v164, %v167
    %v237 = vmax.f32 %v169, 0.0
    %v238 = vmax.f32 %v170, 0.0
    %v239 = vmax.f32 %v171, 0.0
    %v240 = vmax.f32 %v172, 0.0
    %v241 = vmax.f32 %v173, 0.0
    %v242 = vmax.f32 %v174, 0.0
    %v243 = vmax.f32 %v175, 0.0
    %v244 = vmax.f32 %v176, 0.0
    %v245 = vmax.f32 %v177, 0.0
    %v246 = vmax.f32 %v178, 0.0
    %v247 = vmax.f32 %v179, 0.0
    %v248 = vmax.f32 %v180, 0.0
    %v249 = vmax.f32 %v181, 0.0
    %v250 = vmax.f32 %v182, 0.0
    %v251 = vmax.f32 %v183, 0.0
    %v252 = vmax.f32 %v184, 0.0
    %v253 = vmax.f32 %v185, 0.0
    %v254 = vmax.f32 %v186, 0.0
    %v255 = vmax.f32 %v187, 0.0
    %v256 = vmax.f32 %v188, 0.0
    %v257 = vmax.f32 %v189, 0.0
    %v258 = vmax.f32 %v190, 0.0
    %v259 = vmax.f32 %v191, 0.0
    %v260 = vmax.f32 %v192, 0.0
    %v261 = vmax.f32 %v193, 0.0
    %v262 = vmax.f32 %v194, 0.0
    %v263 = vmax.f32 %v195, 0.0
    %v264 = vmax.f32 %v196, 0.0
    %v265 = vmax.f32 %v197, 0.0
    %v266 = vmax.f32 %v198, 0.0
    %v267 = vmax.f32 %v199, 0.0
    %v268 = vmax.f32 %v200, 0.0
    %v269 = vmax.f32 %v201, 0.0
    %v270 = vmax.f32 %v202, 0.0
    %v271 = vmax.f32 %v203, 0.0
    %v272 = vmax.f32 %v204, 0.0
    %v273 = vmax.f32 %v205, 0.0
    %v274 = vmax.f32 %v206, 0.0
    %v275 = vmax.f32 %v207, 0.0
    %v276 = vmax.f32 %v208, 0.0
    %v277 = vmax.f32 %v209, 0.0
    %v278 = vmax.f32 %v210, 0.0
    %v279 = vmax.f32 %v211, 0.0
    %v280 = vmax.f32 %v212, 0.0
    %v281 = vmax.f32 %v213, 0.0
    %v282 = vmax.f32 %v214, 0.0
    %v283 = vmax.f32 %v215, 0.0
    %v284 = vmax.f32 %v216, 0.0
    %v285 = vmax.f32 %v217, 0.0
    %v286 = vmax.f32 %v218, 0.0
    %v287 = vmax.f32 %v219, 0.0
    %v288 = vmax.f32 %v220, 0.0
    %v289 = vmax.f32 %v221, 0.0
    %v290 = vmax.f32 %v222, 0.0
    %v291 = vmax.f32 %v223, 0.0
    %v292 = vmax.f32 %v224, 0.0
    %v293 = vmax.f32 %v225, 0.0
    %v294 = vmax.f32 %v226, 0.0
    %v295 = vmax.f32 %v227, 0.0
    %v296 = vmax.f32 %v228, 0.0
    %v297 = vmax.f32 %v229, 0.0
    %v298 = vmax.f32 %v230, 0.0
    %v299 = vmax.f32 %v231, 0.0
    %v300 = vmax.f32 %v232, 0.0
    %v301 = vmax.f32 %v233, 0.0
    %v302 = vmax.f32 %v234, 0.0
    %v303 = vmax.f32 %v235, 0.0
    %v304 = vmax.f32 %v236, 0.0
    %v305 = vld [vmem:[%s3] sm:$0xff]
    %v306 = vld [vmem:[%s3 + $0x8] sm:$0x1]
    %v307 = vmul.f32 %v237, %v305
    %v308 = vmul.f32 %v238, %v306
    %v309 = vmul.f32 %v239, %v305
    %v310 = vmul.f32 %v240, %v306
    %v311 = vmul.f32 %v241, %v305
    %v312 = vmul.f32 %v242, %v306
    %v313 = vmul.f32 %v243, %v305
    %v314 = vmul.f32 %v244, %v306
    %v315 = vmul.f32 %v245, %v305
    %v316 = vmul.f32 %v246, %v306
    %v317 = vmul.f32 %v247, %v305
    %v318 = vmul.f32 %v248, %v306
    %v319 = vmul.f32 %v249, %v305
    %v320 = vmul.f32 %v250, %v306
    %v321 = vmul.f32 %v251, %v305
    %v322 = vmul.f32 %v252, %v306
    %v323 = vmul.f32 %v253, %v305
    %v324 = vmul.f32 %v254, %v306
    %v325 = vmul.f32 %v255, %v305
    %v326 = vmul.f32 %v256, %v306
    %v327 = vmul.f32 %v257, %v305
    %v328 = vmul.f32 %v258, %v306
    %v329 = vmul.f32 %v259, %v305
    %v330 = vmul.f32 %v260, %v306
    %v331 = vmul.f32 %v261, %v305
    %v332 = vmul.f32 %v262, %v306
    %v333 = vmul.f32 %v263, %v305
    %v334 = vmul.f32 %v264, %v306
    %v335 = vmul.f32 %v265, %v305
    %v336 = vmul.f32 %v266, %v306
    %v337 = vmul.f32 %v267, %v305
    %v338 = vmul.f32 %v268, %v306
    %v339 = vmul.f32 %v269, %v305
    %v340 = vmul.f32 %v270, %v306
    %v341 = vmul.f32 %v271, %v305
    %v342 = vmul.f32 %v272, %v306
    %v343 = vmul.f32 %v273, %v305
    %v344 = vmul.f32 %v274, %v306
    %v345 = vmul.f32 %v275, %v305
    %v346 = vmul.f32 %v276, %v306
    %v347 = vmul.f32 %v277, %v305
    %v348 = vmul.f32 %v278, %v306
    %v349 = vmul.f32 %v279, %v305
    %v350 = vmul.f32 %v280, %v306
    %v351 = vmul.f32 %v281, %v305
    %v352 = vmul.f32 %v282, %v306
    %v353 = vmul.f32 %v283, %v305
    %v354 = vmul.f32 %v284, %v306
    %v355 = vmul.f32 %v285, %v305
    %v356 = vmul.f32 %v286, %v306
    %v357 = vmul.f32 %v287, %v305
    %v358 = vmul.f32 %v288, %v306
    %v359 = vmul.f32 %v289, %v305
    %v360 = vmul.f32 %v290, %v306
    %v361 = vmul.f32 %v291, %v305
    %v362 = vmul.f32 %v292, %v306
    %v363 = vmul.f32 %v293, %v305
    %v364 = vmul.f32 %v294, %v306
    %v365 = vmul.f32 %v295, %v305
    %v366 = vmul.f32 %v296, %v306
    %v367 = vmul.f32 %v297, %v305
    %v368 = vmul.f32 %v298, %v306
    %v369 = vmul.f32 %v299, %v305
    %v370 = vmul.f32 %v300, %v306
    %v371 = vmul.f32 %v301, %v305
    %v372 = vmul.f32 %v302, %v306
    %v373 = vmul.f32 %v303, %v305
    %v374 = vmul.f32 %v304, %v306
    %v375 = vld [vmem:[%s4] sm:$0x1]
    %v376 = vld [vmem:[%s4 + $0x1] sm:$0x1]
    %v377 = vld [vmem:[%s4 + $0x2] sm:$0x1]
    %v378 = vld [vmem:[%s4 + $0x3] sm:$0x1]
    %v379 = vld [vmem:[%s4 + $0x4] sm:$0x1]
    %v380 = vld [vmem:[%s4 + $0x5] sm:$0x1]
    %v381 = vld [vmem:[%s4 + $0x6] sm:$0x1]
    %v382 = vld [vmem:[%s4 + $0x7] sm:$0x1]
    %v383 = vld [vmem:[%s4 + $0x8] sm:$0x1]
    %v384 = vld [vmem:[%s4 + $0x9] sm:$0x1]
    %v385 = vld [vmem:[%s4 + $0xa] sm:$0x1]
    %v386 = vld [vmem:[%s4 + $0xb] sm:$0x1]
    %v387 = vld [vmem:[%s4 + $0xc] sm:$0x1]
    %v388 = vld [vmem:[%s4 + $0xd] sm:$0x1]
    %v389 = vld [vmem:[%s4 + $0xe] sm:$0x1]
    %v390 = vld [vmem:[%s4 + $0xf] sm:$0x1]
    %v391 = vld [vmem:[%s4 + $0x10] sm:$0x1]
    %v409 = vperm.slane %v375, 0
    %v410 = vperm.slane %v376, 0
    %v411 = vperm.slane %v377, 0
    %v412 = vperm.slane %v378, 0
    %v413 = vperm.slane %v379, 0
    %v414 = vperm.slane %v380, 0
    %v415 = vperm.slane %v381, 0
    %v416 = vperm.slane %v382, 0
    %v417 = vperm.slane %v383, 0
    %v418 = vperm.slane %v384, 0
    %v419 = vperm.slane %v385, 0
    %v420 = vperm.slane %v386, 0
    %v421 = vperm.slane %v387, 0
    %v422 = vperm.slane %v388, 0
    %v423 = vperm.slane %v389, 0
    %v424 = vperm.slane %v390, 0
    %v425 = vperm.slane %v391, 0
    %v443 = vmul.f32 %v307, %v409
    %v444 = vmul.f32 %v308, %v409
    %v445 = vmul.f32 %v309, %v410
    %v446 = vmul.f32 %v310, %v410
    %v447 = vmul.f32 %v311, %v411
    %v448 = vmul.f32 %v312, %v411
    %v449 = vmul.f32 %v313, %v412
    %v450 = vmul.f32 %v314, %v412
    %v451 = vmul.f32 %v315, %v413
    %v452 = vmul.f32 %v316, %v413
    %v453 = vmul.f32 %v317, %v414
    %v454 = vmul.f32 %v318, %v414
    %v455 = vmul.f32 %v319, %v415
    %v456 = vmul.f32 %v320, %v415
    %v457 = vmul.f32 %v321, %v416
    %v458 = vmul.f32 %v322, %v416
    %v459 = vmul.f32 %v323, %v417
    %v460 = vmul.f32 %v324, %v417
    %v461 = vmul.f32 %v325, %v418
    %v462 = vmul.f32 %v326, %v418
    %v463 = vmul.f32 %v327, %v419
    %v464 = vmul.f32 %v328, %v419
    %v465 = vmul.f32 %v329, %v420
    %v466 = vmul.f32 %v330, %v420
    %v467 = vmul.f32 %v331, %v421
    %v468 = vmul.f32 %v332, %v421
    %v469 = vmul.f32 %v333, %v422
    %v470 = vmul.f32 %v334, %v422
    %v471 = vmul.f32 %v335, %v423
    %v472 = vmul.f32 %v336, %v423
    %v473 = vmul.f32 %v337, %v424
    %v474 = vmul.f32 %v338, %v424
    %v475 = vmul.f32 %v339, %v425
    %v476 = vmul.f32 %v340, %v425
    %v477 = vmul.f32 %v341, %v409
    %v478 = vmul.f32 %v342, %v409
    %v479 = vmul.f32 %v343, %v410
    %v480 = vmul.f32 %v344, %v410
    %v481 = vmul.f32 %v345, %v411
    %v482 = vmul.f32 %v346, %v411
    %v483 = vmul.f32 %v347, %v412
    %v484 = vmul.f32 %v348, %v412
    %v485 = vmul.f32 %v349, %v413
    %v486 = vmul.f32 %v350, %v413
    %v487 = vmul.f32 %v351, %v414
    %v488 = vmul.f32 %v352, %v414
    %v489 = vmul.f32 %v353, %v415
    %v490 = vmul.f32 %v354, %v415
    %v491 = vmul.f32 %v355, %v416
    %v492 = vmul.f32 %v356, %v416
    %v493 = vmul.f32 %v357, %v417
    %v494 = vmul.f32 %v358, %v417
    %v495 = vmul.f32 %v359, %v418
    %v496 = vmul.f32 %v360, %v418
    %v497 = vmul.f32 %v361, %v419
    %v498 = vmul.f32 %v362, %v419
    %v499 = vmul.f32 %v363, %v420
    %v500 = vmul.f32 %v364, %v420
    %v501 = vmul.f32 %v365, %v421
    %v502 = vmul.f32 %v366, %v421
    %v503 = vmul.f32 %v367, %v422
    %v504 = vmul.f32 %v368, %v422
    %v505 = vmul.f32 %v369, %v423
    %v506 = vmul.f32 %v370, %v423
    %v507 = vmul.f32 %v371, %v424
    %v508 = vmul.f32 %v372, %v424
    %v509 = vmul.f32 %v373, %v425
    %v510 = vmul.f32 %v374, %v425
    %v511 = vpack.c.bf16 %v443, %v443
    %v512 = vpack.c.bf16 %v444, %v444
    %v513 = vpack.c.bf16 %v445, %v445
    %v514 = vpack.c.bf16 %v446, %v446
    %v515 = vpack.c.bf16 %v447, %v447
    %v516 = vpack.c.bf16 %v448, %v448
    %v517 = vpack.c.bf16 %v449, %v449
    %v518 = vpack.c.bf16 %v450, %v450
    %v519 = vpack.c.bf16 %v451, %v451
    %v520 = vpack.c.bf16 %v452, %v452
    %v521 = vpack.c.bf16 %v453, %v453
    %v522 = vpack.c.bf16 %v454, %v454
    %v523 = vpack.c.bf16 %v455, %v455
    %v524 = vpack.c.bf16 %v456, %v456
    %v525 = vpack.c.bf16 %v457, %v457
    %v526 = vpack.c.bf16 %v458, %v458
    %v527 = vpack.c.bf16 %v459, %v459
    %v528 = vpack.c.bf16 %v460, %v460
    %v529 = vpack.c.bf16 %v461, %v461
    %v530 = vpack.c.bf16 %v462, %v462
    %v531 = vpack.c.bf16 %v463, %v463
    %v532 = vpack.c.bf16 %v464, %v464
    %v533 = vpack.c.bf16 %v465, %v465
    %v534 = vpack.c.bf16 %v466, %v466
    %v535 = vpack.c.bf16 %v467, %v467
    %v536 = vpack.c.bf16 %v468, %v468
    %v537 = vpack.c.bf16 %v469, %v469
    %v538 = vpack.c.bf16 %v470, %v470
    %v539 = vpack.c.bf16 %v471, %v471
    %v540 = vpack.c.bf16 %v472, %v472
    %v541 = vpack.c.bf16 %v473, %v473
    %v542 = vpack.c.bf16 %v474, %v474
    %v543 = vpack.c.bf16 %v475, %v475
    %v544 = vpack.c.bf16 %v476, %v476
    %v545 = vpack.c.bf16 %v477, %v477
    %v546 = vpack.c.bf16 %v478, %v478
    %v547 = vpack.c.bf16 %v479, %v479
    %v548 = vpack.c.bf16 %v480, %v480
    %v549 = vpack.c.bf16 %v481, %v481
    %v550 = vpack.c.bf16 %v482, %v482
    %v551 = vpack.c.bf16 %v483, %v483
    %v552 = vpack.c.bf16 %v484, %v484
    %v553 = vpack.c.bf16 %v485, %v485
    %v554 = vpack.c.bf16 %v486, %v486
    %v555 = vpack.c.bf16 %v487, %v487
    %v556 = vpack.c.bf16 %v488, %v488
    %v557 = vpack.c.bf16 %v489, %v489
    %v558 = vpack.c.bf16 %v490, %v490
    %v559 = vpack.c.bf16 %v491, %v491
    %v560 = vpack.c.bf16 %v492, %v492
    %v561 = vpack.c.bf16 %v493, %v493
    %v562 = vpack.c.bf16 %v494, %v494
    %v563 = vpack.c.bf16 %v495, %v495
    %v564 = vpack.c.bf16 %v496, %v496
    %v565 = vpack.c.bf16 %v497, %v497
    %v566 = vpack.c.bf16 %v498, %v498
    %v567 = vpack.c.bf16 %v499, %v499
    %v568 = vpack.c.bf16 %v500, %v500
    %v569 = vpack.c.bf16 %v501, %v501
    %v570 = vpack.c.bf16 %v502, %v502
    %v571 = vpack.c.bf16 %v503, %v503
    %v572 = vpack.c.bf16 %v504, %v504
    %v573 = vpack.c.bf16 %v505, %v505
    %v574 = vpack.c.bf16 %v506, %v506
    %v575 = vpack.c.bf16 %v507, %v507
    %v576 = vpack.c.bf16 %v508, %v508
    %v577 = vpack.c.bf16 %v509, %v509
    %v578 = vpack.c.bf16 %v510, %v510
    %v611 = vunpack.c.l.b16 %v511
    %v612 = vunpack.c.l.b16 %v512
    %v613 = vunpack.c.l.b16 %v515
    %v614 = vunpack.c.l.b16 %v516
    %v615 = vunpack.c.l.b16 %v519
    %v616 = vunpack.c.l.b16 %v520
    %v617 = vunpack.c.l.b16 %v523
    %v618 = vunpack.c.l.b16 %v524
    %v619 = vunpack.c.l.b16 %v527
    %v620 = vunpack.c.l.b16 %v528
    %v621 = vunpack.c.l.b16 %v531
    %v622 = vunpack.c.l.b16 %v532
    %v623 = vunpack.c.l.b16 %v535
    %v624 = vunpack.c.l.b16 %v536
    %v625 = vunpack.c.l.b16 %v539
    %v626 = vunpack.c.l.b16 %v540
    %v627 = vunpack.c.l.b16 %v545
    %v628 = vunpack.c.l.b16 %v546
    %v629 = vunpack.c.l.b16 %v549
    %v630 = vunpack.c.l.b16 %v550
    %v631 = vunpack.c.l.b16 %v553
    %v632 = vunpack.c.l.b16 %v554
    %v633 = vunpack.c.l.b16 %v557
    %v634 = vunpack.c.l.b16 %v558
    %v635 = vunpack.c.l.b16 %v561
    %v636 = vunpack.c.l.b16 %v562
    %v637 = vunpack.c.l.b16 %v565
    %v638 = vunpack.c.l.b16 %v566
    %v639 = vunpack.c.l.b16 %v569
    %v640 = vunpack.c.l.b16 %v570
    %v641 = vunpack.c.l.b16 %v573
    %v642 = vunpack.c.l.b16 %v574
    %v643 = vpack.c.b16 %v612, %v611
    %v644 = vpack.c.b16 %v614, %v613
    %v645 = vpack.c.b16 %v616, %v615
    %v646 = vpack.c.b16 %v618, %v617
    %v647 = vpack.c.b16 %v620, %v619
    %v648 = vpack.c.b16 %v622, %v621
    %v649 = vpack.c.b16 %v624, %v623
    %v650 = vpack.c.b16 %v626, %v625
    %v651 = vpack.c.b16 %v628, %v627
    %v652 = vpack.c.b16 %v630, %v629
    %v653 = vpack.c.b16 %v632, %v631
    %v654 = vpack.c.b16 %v634, %v633
    %v655 = vpack.c.b16 %v636, %v635
    %v656 = vpack.c.b16 %v638, %v637
    %v657 = vpack.c.b16 %v640, %v639
    %v658 = vpack.c.b16 %v642, %v641
    %v660 = vshrl.u32 %v643, 16
    %v662 = vshll.u32 %v643, 16
    %v664 = vrot.slane %v662, 1
    %v665 = vor.u32 %v660, %v664
    %v667 = vshrl.u32 %v644, 16
    %v669 = vshll.u32 %v644, 16
    %v671 = vrot.slane %v669, 1
    %v672 = vor.u32 %v667, %v671
    %v674 = vshrl.u32 %v645, 16
    %v676 = vshll.u32 %v645, 16
    %v678 = vrot.slane %v676, 1
    %v679 = vor.u32 %v674, %v678
    %v681 = vshrl.u32 %v646, 16
    %v683 = vshll.u32 %v646, 16
    %v685 = vrot.slane %v683, 1
    %v686 = vor.u32 %v681, %v685
    %v688 = vshrl.u32 %v647, 16
    %v690 = vshll.u32 %v647, 16
    %v692 = vrot.slane %v690, 1
    %v693 = vor.u32 %v688, %v692
    %v695 = vshrl.u32 %v648, 16
    %v697 = vshll.u32 %v648, 16
    %v699 = vrot.slane %v697, 1
    %v700 = vor.u32 %v695, %v699
    %v702 = vshrl.u32 %v649, 16
    %v704 = vshll.u32 %v649, 16
    %v706 = vrot.slane %v704, 1
    %v707 = vor.u32 %v702, %v706
    %v709 = vshrl.u32 %v650, 16
    %v711 = vshll.u32 %v650, 16
    %v713 = vrot.slane %v711, 1
    %v714 = vor.u32 %v709, %v713
    %v716 = vshrl.u32 %v651, 16
    %v718 = vshll.u32 %v651, 16
    %v720 = vrot.slane %v718, 1
    %v721 = vor.u32 %v716, %v720
    %v723 = vshrl.u32 %v652, 16
    %v725 = vshll.u32 %v652, 16
    %v727 = vrot.slane %v725, 1
    %v728 = vor.u32 %v723, %v727
    %v730 = vshrl.u32 %v653, 16
    %v732 = vshll.u32 %v653, 16
    %v734 = vrot.slane %v732, 1
    %v735 = vor.u32 %v730, %v734
    %v737 = vshrl.u32 %v654, 16
    %v739 = vshll.u32 %v654, 16
    %v741 = vrot.slane %v739, 1
    %v742 = vor.u32 %v737, %v741
    %v744 = vshrl.u32 %v655, 16
    %v746 = vshll.u32 %v655, 16
    %v748 = vrot.slane %v746, 1
    %v749 = vor.u32 %v744, %v748
    %v751 = vshrl.u32 %v656, 16
    %v753 = vshll.u32 %v656, 16
    %v755 = vrot.slane %v753, 1
    %v756 = vor.u32 %v751, %v755
    %v758 = vshrl.u32 %v657, 16
    %v760 = vshll.u32 %v657, 16
    %v762 = vrot.slane %v760, 1
    %v763 = vor.u32 %v758, %v762
    %v765 = vshrl.u32 %v658, 16
    %v767 = vshll.u32 %v658, 16
    %v769 = vrot.slane %v767, 1
    %v770 = vor.u32 %v765, %v769
    %771 = vrot.lane.b32.xlu0 %v665, 8
    %v772 = vpop.permute.xlu0 %771
    %773 = vrot.lane.b32.xlu0 %v672, 8
    %v774 = vpop.permute.xlu0 %773
    %775 = vrot.lane.b32.xlu0 %v679, 8
    %v776 = vpop.permute.xlu0 %775
    %777 = vrot.lane.b32.xlu0 %v686, 8
    %v778 = vpop.permute.xlu0 %777
    %779 = vrot.lane.b32.xlu0 %v693, 8
    %v780 = vpop.permute.xlu0 %779
    %781 = vrot.lane.b32.xlu0 %v700, 8
    %v782 = vpop.permute.xlu0 %781
    %783 = vrot.lane.b32.xlu0 %v707, 8
    %v784 = vpop.permute.xlu0 %783
    %785 = vrot.lane.b32.xlu0 %v714, 8
    %v786 = vpop.permute.xlu0 %785
    %787 = vrot.lane.b32.xlu0 %v721, 8
    %v788 = vpop.permute.xlu0 %787
    %789 = vrot.lane.b32.xlu0 %v728, 8
    %v790 = vpop.permute.xlu0 %789
    %791 = vrot.lane.b32.xlu0 %v735, 8
    %v792 = vpop.permute.xlu0 %791
    %793 = vrot.lane.b32.xlu0 %v742, 8
    %v794 = vpop.permute.xlu0 %793
    %795 = vrot.lane.b32.xlu0 %v749, 8
    %v796 = vpop.permute.xlu0 %795
    %797 = vrot.lane.b32.xlu0 %v756, 8
    %v798 = vpop.permute.xlu0 %797
    %799 = vrot.lane.b32.xlu0 %v763, 8
    %v800 = vpop.permute.xlu0 %799
    %801 = vrot.lane.b32.xlu0 %v770, 8
    %v802 = vpop.permute.xlu0 %801
    %v819 = vunpack.c.l.b16 %v513
    %v820 = vunpack.c.l.b16 %v517
    %v821 = vunpack.c.l.b16 %v521
    %v822 = vunpack.c.l.b16 %v525
    %v823 = vunpack.c.l.b16 %v529
    %v824 = vunpack.c.l.b16 %v533
    %v825 = vunpack.c.l.b16 %v537
    %v826 = vunpack.c.l.b16 %v541
    %v827 = vunpack.c.l.b16 %v547
    %v828 = vunpack.c.l.b16 %v551
    %v829 = vunpack.c.l.b16 %v555
    %v830 = vunpack.c.l.b16 %v559
    %v831 = vunpack.c.l.b16 %v563
    %v832 = vunpack.c.l.b16 %v567
    %v833 = vunpack.c.l.b16 %v571
    %v834 = vunpack.c.l.b16 %v575
    %v835 = vpack.c.b16 %v819, %v819
    %v836 = vpack.c.b16 %v820, %v820
    %v837 = vpack.c.b16 %v821, %v821
    %v838 = vpack.c.b16 %v822, %v822
    %v839 = vpack.c.b16 %v823, %v823
    %v840 = vpack.c.b16 %v824, %v824
    %v841 = vpack.c.b16 %v825, %v825
    %v842 = vpack.c.b16 %v826, %v826
    %v843 = vpack.c.b16 %v827, %v827
    %v844 = vpack.c.b16 %v828, %v828
    %v845 = vpack.c.b16 %v829, %v829
    %v846 = vpack.c.b16 %v830, %v830
    %v847 = vpack.c.b16 %v831, %v831
    %v848 = vpack.c.b16 %v832, %v832
    %v849 = vpack.c.b16 %v833, %v833
    %v850 = vpack.c.b16 %v834, %v834
    %851 = vrot.lane.b32.xlu0 %v835, 12
    %v852 = vpop.permute.xlu0 %851
    %853 = vrot.lane.b32.xlu0 %v836, 12
    %v854 = vpop.permute.xlu0 %853
    %855 = vrot.lane.b32.xlu0 %v837, 12
    %v856 = vpop.permute.xlu0 %855
    %857 = vrot.lane.b32.xlu0 %v838, 12
    %v858 = vpop.permute.xlu0 %857
    %859 = vrot.lane.b32.xlu0 %v839, 12
    %v860 = vpop.permute.xlu0 %859
    %861 = vrot.lane.b32.xlu0 %v840, 12
    %v862 = vpop.permute.xlu0 %861
    %863 = vrot.lane.b32.xlu0 %v841, 12
    %v864 = vpop.permute.xlu0 %863
    %865 = vrot.lane.b32.xlu0 %v842, 12
    %v866 = vpop.permute.xlu0 %865
    %867 = vrot.lane.b32.xlu0 %v843, 12
    %v868 = vpop.permute.xlu0 %867
    %869 = vrot.lane.b32.xlu0 %v844, 12
    %v870 = vpop.permute.xlu0 %869
    %871 = vrot.lane.b32.xlu0 %v845, 12
    %v872 = vpop.permute.xlu0 %871
    %873 = vrot.lane.b32.xlu0 %v846, 12
    %v874 = vpop.permute.xlu0 %873
    %875 = vrot.lane.b32.xlu0 %v847, 12
    %v876 = vpop.permute.xlu0 %875
    %877 = vrot.lane.b32.xlu0 %v848, 12
    %v878 = vpop.permute.xlu0 %877
    %879 = vrot.lane.b32.xlu0 %v849, 12
    %v880 = vpop.permute.xlu0 %879
    %881 = vrot.lane.b32.xlu0 %v850, 12
    %v882 = vpop.permute.xlu0 %881
    %v899 = vunpack.c.l.b16 %v514
    %v900 = vunpack.c.l.b16 %v518
    %v901 = vunpack.c.l.b16 %v522
    %v902 = vunpack.c.l.b16 %v526
    %v903 = vunpack.c.l.b16 %v530
    %v904 = vunpack.c.l.b16 %v534
    %v905 = vunpack.c.l.b16 %v538
    %v906 = vunpack.c.l.b16 %v542
    %v907 = vunpack.c.l.b16 %v548
    %v908 = vunpack.c.l.b16 %v552
    %v909 = vunpack.c.l.b16 %v556
    %v910 = vunpack.c.l.b16 %v560
    %v911 = vunpack.c.l.b16 %v564
    %v912 = vunpack.c.l.b16 %v568
    %v913 = vunpack.c.l.b16 %v572
    %v914 = vunpack.c.l.b16 %v576
    %v915 = vpack.c.b16 %v899, %v819
    %v916 = vpack.c.b16 %v900, %v820
    %v917 = vpack.c.b16 %v901, %v821
    %v918 = vpack.c.b16 %v902, %v822
    %v919 = vpack.c.b16 %v903, %v823
    %v920 = vpack.c.b16 %v904, %v824
    %v921 = vpack.c.b16 %v905, %v825
    %v922 = vpack.c.b16 %v906, %v826
    %v923 = vpack.c.b16 %v907, %v827
    %v924 = vpack.c.b16 %v908, %v828
    %v925 = vpack.c.b16 %v909, %v829
    %v926 = vpack.c.b16 %v910, %v830
    %v927 = vpack.c.b16 %v911, %v831
    %v928 = vpack.c.b16 %v912, %v832
    %v929 = vpack.c.b16 %v913, %v833
    %v930 = vpack.c.b16 %v914, %v834
    %v932 = vshrl.u32 %v915, 16
    %v934 = vshll.u32 %v915, 16
    %v936 = vrot.slane %v934, 1
    %v937 = vor.u32 %v932, %v936
    %v939 = vshrl.u32 %v916, 16
    %v941 = vshll.u32 %v916, 16
    %v943 = vrot.slane %v941, 1
    %v944 = vor.u32 %v939, %v943
    %v946 = vshrl.u32 %v917, 16
    %v948 = vshll.u32 %v917, 16
    %v950 = vrot.slane %v948, 1
    %v951 = vor.u32 %v946, %v950
    %v953 = vshrl.u32 %v918, 16
    %v955 = vshll.u32 %v918, 16
    %v957 = vrot.slane %v955, 1
    %v958 = vor.u32 %v953, %v957
    %v960 = vshrl.u32 %v919, 16
    %v962 = vshll.u32 %v919, 16
    %v964 = vrot.slane %v962, 1
    %v965 = vor.u32 %v960, %v964
    %v967 = vshrl.u32 %v920, 16
    %v969 = vshll.u32 %v920, 16
    %v971 = vrot.slane %v969, 1
    %v972 = vor.u32 %v967, %v971
    %v974 = vshrl.u32 %v921, 16
    %v976 = vshll.u32 %v921, 16
    %v978 = vrot.slane %v976, 1
    %v979 = vor.u32 %v974, %v978
    %v981 = vshrl.u32 %v922, 16
    %v983 = vshll.u32 %v922, 16
    %v985 = vrot.slane %v983, 1
    %v986 = vor.u32 %v981, %v985
    %v988 = vshrl.u32 %v923, 16
    %v990 = vshll.u32 %v923, 16
    %v992 = vrot.slane %v990, 1
    %v993 = vor.u32 %v988, %v992
    %v995 = vshrl.u32 %v924, 16
    %v997 = vshll.u32 %v924, 16
    %v999 = vrot.slane %v997, 1
    %v1000 = vor.u32 %v995, %v999
    %v1002 = vshrl.u32 %v925, 16
    %v1004 = vshll.u32 %v925, 16
    %v1006 = vrot.slane %v1004, 1
    %v1007 = vor.u32 %v1002, %v1006
    %v1009 = vshrl.u32 %v926, 16
    %v1011 = vshll.u32 %v926, 16
    %v1013 = vrot.slane %v1011, 1
    %v1014 = vor.u32 %v1009, %v1013
    %v1016 = vshrl.u32 %v927, 16
    %v1018 = vshll.u32 %v927, 16
    %v1020 = vrot.slane %v1018, 1
    %v1021 = vor.u32 %v1016, %v1020
    %v1023 = vshrl.u32 %v928, 16
    %v1025 = vshll.u32 %v928, 16
    %v1027 = vrot.slane %v1025, 1
    %v1028 = vor.u32 %v1023, %v1027
    %v1030 = vshrl.u32 %v929, 16
    %v1032 = vshll.u32 %v929, 16
    %v1034 = vrot.slane %v1032, 1
    %v1035 = vor.u32 %v1030, %v1034
    %v1037 = vshrl.u32 %v930, 16
    %v1039 = vshll.u32 %v930, 16
    %v1041 = vrot.slane %v1039, 1
    %v1042 = vor.u32 %v1037, %v1041
    %1043 = vrot.lane.b32.xlu0 %v937, 20
    %v1044 = vpop.permute.xlu0 %1043
    %1045 = vrot.lane.b32.xlu0 %v944, 20
    %v1046 = vpop.permute.xlu0 %1045
    %1047 = vrot.lane.b32.xlu0 %v951, 20
    %v1048 = vpop.permute.xlu0 %1047
    %1049 = vrot.lane.b32.xlu0 %v958, 20
    %v1050 = vpop.permute.xlu0 %1049
    %1051 = vrot.lane.b32.xlu0 %v965, 20
    %v1052 = vpop.permute.xlu0 %1051
    %1053 = vrot.lane.b32.xlu0 %v972, 20
    %v1054 = vpop.permute.xlu0 %1053
    %1055 = vrot.lane.b32.xlu0 %v979, 20
    %v1056 = vpop.permute.xlu0 %1055
    %1057 = vrot.lane.b32.xlu0 %v986, 20
    %v1058 = vpop.permute.xlu0 %1057
    %1059 = vrot.lane.b32.xlu0 %v993, 20
    %v1060 = vpop.permute.xlu0 %1059
    %1061 = vrot.lane.b32.xlu0 %v1000, 20
    %v1062 = vpop.permute.xlu0 %1061
    %1063 = vrot.lane.b32.xlu0 %v1007, 20
    %v1064 = vpop.permute.xlu0 %1063
    %1065 = vrot.lane.b32.xlu0 %v1014, 20
    %v1066 = vpop.permute.xlu0 %1065
    %1067 = vrot.lane.b32.xlu0 %v1021, 20
    %v1068 = vpop.permute.xlu0 %1067
    %1069 = vrot.lane.b32.xlu0 %v1028, 20
    %v1070 = vpop.permute.xlu0 %1069
    %1071 = vrot.lane.b32.xlu0 %v1035, 20
    %v1072 = vpop.permute.xlu0 %1071
    %1073 = vrot.lane.b32.xlu0 %v1042, 20
    %v1074 = vpop.permute.xlu0 %1073
    %v1077 = vunpack.c.l.b16 %v543
    %v1078 = vunpack.c.l.b16 %v577
    %v1079 = vpack.c.b16 %v613, %v613
    %v1080 = vpack.c.b16 %v615, %v615
    %v1081 = vpack.c.b16 %v617, %v617
    %v1082 = vpack.c.b16 %v619, %v619
    %v1083 = vpack.c.b16 %v621, %v621
    %v1084 = vpack.c.b16 %v623, %v623
    %v1085 = vpack.c.b16 %v625, %v625
    %v1086 = vpack.c.b16 %v1077, %v1077
    %v1087 = vpack.c.b16 %v629, %v629
    %v1088 = vpack.c.b16 %v631, %v631
    %v1089 = vpack.c.b16 %v633, %v633
    %v1090 = vpack.c.b16 %v635, %v635
    %v1091 = vpack.c.b16 %v637, %v637
    %v1092 = vpack.c.b16 %v639, %v639
    %v1093 = vpack.c.b16 %v641, %v641
    %v1094 = vpack.c.b16 %v1078, %v1078
    %1095 = vrot.lane.b32.xlu0 %v1079, 24
    %v1096 = vpop.permute.xlu0 %1095
    %1097 = vrot.lane.b32.xlu0 %v1080, 24
    %v1098 = vpop.permute.xlu0 %1097
    %1099 = vrot.lane.b32.xlu0 %v1081, 24
    %v1100 = vpop.permute.xlu0 %1099
    %1101 = vrot.lane.b32.xlu0 %v1082, 24
    %v1102 = vpop.permute.xlu0 %1101
    %1103 = vrot.lane.b32.xlu0 %v1083, 24
    %v1104 = vpop.permute.xlu0 %1103
    %1105 = vrot.lane.b32.xlu0 %v1084, 24
    %v1106 = vpop.permute.xlu0 %1105
    %1107 = vrot.lane.b32.xlu0 %v1085, 24
    %v1108 = vpop.permute.xlu0 %1107
    %1109 = vrot.lane.b32.xlu0 %v1086, 24
    %v1110 = vpop.permute.xlu0 %1109
    %1111 = vrot.lane.b32.xlu0 %v1087, 24
    %v1112 = vpop.permute.xlu0 %1111
    %1113 = vrot.lane.b32.xlu0 %v1088, 24
    %v1114 = vpop.permute.xlu0 %1113
    %1115 = vrot.lane.b32.xlu0 %v1089, 24
    %v1116 = vpop.permute.xlu0 %1115
    %1117 = vrot.lane.b32.xlu0 %v1090, 24
    %v1118 = vpop.permute.xlu0 %1117
    %1119 = vrot.lane.b32.xlu0 %v1091, 24
    %v1120 = vpop.permute.xlu0 %1119
    %1121 = vrot.lane.b32.xlu0 %v1092, 24
    %v1122 = vpop.permute.xlu0 %1121
    %1123 = vrot.lane.b32.xlu0 %v1093, 24
    %v1124 = vpop.permute.xlu0 %1123
    %1125 = vrot.lane.b32.xlu0 %v1094, 24
    %v1126 = vpop.permute.xlu0 %1125
    %v1129 = vunpack.c.l.b16 %v544
    %v1130 = vunpack.c.l.b16 %v578
    %v1131 = vpack.c.b16 %v1129, %v1077
    %v1132 = vpack.c.b16 %v1130, %v1078
    %v1134 = vshrl.u32 %v1131, 16
    %v1136 = vshll.u32 %v1131, 16
    %v1138 = vrot.slane %v1136, 1
    %v1139 = vor.u32 %v1134, %v1138
    %v1141 = vshrl.u32 %v1132, 16
    %v1143 = vshll.u32 %v1132, 16
    %v1145 = vrot.slane %v1143, 1
    %v1146 = vor.u32 %v1141, %v1145
    %1147 = vrot.lane.b32.xlu0 %v672, 32
    %v1148 = vpop.permute.xlu0 %1147
    %1149 = vrot.lane.b32.xlu0 %v679, 32
    %v1150 = vpop.permute.xlu0 %1149
    %1151 = vrot.lane.b32.xlu0 %v686, 32
    %v1152 = vpop.permute.xlu0 %1151
    %1153 = vrot.lane.b32.xlu0 %v693, 32
    %v1154 = vpop.permute.xlu0 %1153
    %1155 = vrot.lane.b32.xlu0 %v700, 32
    %v1156 = vpop.permute.xlu0 %1155
    %1157 = vrot.lane.b32.xlu0 %v707, 32
    %v1158 = vpop.permute.xlu0 %1157
    %1159 = vrot.lane.b32.xlu0 %v714, 32
    %v1160 = vpop.permute.xlu0 %1159
    %1161 = vrot.lane.b32.xlu0 %v1139, 32
    %v1162 = vpop.permute.xlu0 %1161
    %1163 = vrot.lane.b32.xlu0 %v728, 32
    %v1164 = vpop.permute.xlu0 %1163
    %1165 = vrot.lane.b32.xlu0 %v735, 32
    %v1166 = vpop.permute.xlu0 %1165
    %1167 = vrot.lane.b32.xlu0 %v742, 32
    %v1168 = vpop.permute.xlu0 %1167
    %1169 = vrot.lane.b32.xlu0 %v749, 32
    %v1170 = vpop.permute.xlu0 %1169
    %1171 = vrot.lane.b32.xlu0 %v756, 32
    %v1172 = vpop.permute.xlu0 %1171
    %1173 = vrot.lane.b32.xlu0 %v763, 32
    %v1174 = vpop.permute.xlu0 %1173
    %1175 = vrot.lane.b32.xlu0 %v770, 32
    %v1176 = vpop.permute.xlu0 %1175
    %1177 = vrot.lane.b32.xlu0 %v1146, 32
    %v1178 = vpop.permute.xlu0 %1177
    %vm1179 = vcmask 64512
    %v1182 = vsel %vm1179, %v511, %v772
    %v1185 = vsel %vm1179, %v515, %v774
    %v1188 = vsel %vm1179, %v519, %v776
    %v1191 = vsel %vm1179, %v523, %v778
    %v1194 = vsel %vm1179, %v527, %v780
    %v1197 = vsel %vm1179, %v531, %v782
    %v1200 = vsel %vm1179, %v535, %v784
    %v1203 = vsel %vm1179, %v539, %v786
    %v1206 = vsel %vm1179, %v545, %v788
    %v1209 = vsel %vm1179, %v549, %v790
    %v1212 = vsel %vm1179, %v553, %v792
    %v1215 = vsel %vm1179, %v557, %v794
    %v1218 = vsel %vm1179, %v561, %v796
    %v1221 = vsel %vm1179, %v565, %v798
    %v1224 = vsel %vm1179, %v569, %v800
    %v1227 = vsel %vm1179, %v573, %v802
    %vm1228 = vcmask 97280
    %v1230 = vsel %vm1228, %v1182, %v852
    %v1232 = vsel %vm1228, %v1185, %v854
    %v1234 = vsel %vm1228, %v1188, %v856
    %v1236 = vsel %vm1228, %v1191, %v858
    %v1238 = vsel %vm1228, %v1194, %v860
    %v1240 = vsel %vm1228, %v1197, %v862
    %v1242 = vsel %vm1228, %v1200, %v864
    %v1244 = vsel %vm1228, %v1203, %v866
    %v1246 = vsel %vm1228, %v1206, %v868
    %v1248 = vsel %vm1228, %v1209, %v870
    %v1250 = vsel %vm1228, %v1212, %v872
    %v1252 = vsel %vm1228, %v1215, %v874
    %v1254 = vsel %vm1228, %v1218, %v876
    %v1256 = vsel %vm1228, %v1221, %v878
    %v1258 = vsel %vm1228, %v1224, %v880
    %v1260 = vsel %vm1228, %v1227, %v882
    %vm1261 = vcmask 162816
    %v1263 = vsel %vm1261, %v1230, %v1044
    %v1265 = vsel %vm1261, %v1232, %v1046
    %v1267 = vsel %vm1261, %v1234, %v1048
    %v1269 = vsel %vm1261, %v1236, %v1050
    %v1271 = vsel %vm1261, %v1238, %v1052
    %v1273 = vsel %vm1261, %v1240, %v1054
    %v1275 = vsel %vm1261, %v1242, %v1056
    %v1277 = vsel %vm1261, %v1244, %v1058
    %v1279 = vsel %vm1261, %v1246, %v1060
    %v1281 = vsel %vm1261, %v1248, %v1062
    %v1283 = vsel %vm1261, %v1250, %v1064
    %v1285 = vsel %vm1261, %v1252, %v1066
    %v1287 = vsel %vm1261, %v1254, %v1068
    %v1289 = vsel %vm1261, %v1256, %v1070
    %v1291 = vsel %vm1261, %v1258, %v1072
    %v1293 = vsel %vm1261, %v1260, %v1074
    %vm1294 = vcmask 195584
    %v1296 = vsel %vm1294, %v1263, %v1096
    %v1298 = vsel %vm1294, %v1265, %v1098
    %v1300 = vsel %vm1294, %v1267, %v1100
    %v1302 = vsel %vm1294, %v1269, %v1102
    %v1304 = vsel %vm1294, %v1271, %v1104
    %v1306 = vsel %vm1294, %v1273, %v1106
    %v1308 = vsel %vm1294, %v1275, %v1108
    %v1310 = vsel %vm1294, %v1277, %v1110
    %v1312 = vsel %vm1294, %v1279, %v1112
    %v1314 = vsel %vm1294, %v1281, %v1114
    %v1316 = vsel %vm1294, %v1283, %v1116
    %v1318 = vsel %vm1294, %v1285, %v1118
    %v1320 = vsel %vm1294, %v1287, %v1120
    %v1322 = vsel %vm1294, %v1289, %v1122
    %v1324 = vsel %vm1294, %v1291, %v1124
    %v1326 = vsel %vm1294, %v1293, %v1126
    %vm1327 = vcmask 261120
    %v1329 = vsel %vm1327, %v1296, %v1148
    %v1331 = vsel %vm1327, %v1298, %v1150
    %v1333 = vsel %vm1327, %v1300, %v1152
    %v1335 = vsel %vm1327, %v1302, %v1154
    %v1337 = vsel %vm1327, %v1304, %v1156
    %v1339 = vsel %vm1327, %v1306, %v1158
    %v1341 = vsel %vm1327, %v1308, %v1160
    %v1343 = vsel %vm1327, %v1310, %v1162
    %v1345 = vsel %vm1327, %v1312, %v1164
    %v1347 = vsel %vm1327, %v1314, %v1166
    %v1349 = vsel %vm1327, %v1316, %v1168
    %v1351 = vsel %vm1327, %v1318, %v1170
    %v1353 = vsel %vm1327, %v1320, %v1172
    %v1355 = vsel %vm1327, %v1322, %v1174
    %v1357 = vsel %vm1327, %v1324, %v1176
    %v1359 = vsel %vm1327, %v1326, %v1178
    %v1360 = vld [vmem:[%s5] sm:$0xf]
    %v1361 = vld [vmem:[%s5 + $0x4] sm:$0xf]
    %v1362 = vld [vmem:[%s5 + $0x8] sm:$0xf]
    %v1363 = vld [vmem:[%s5 + $0xc] sm:$0xf]
    %v1364 = vld [vmem:[%s5 + $0x10] sm:$0x3]
    %v1381 = vunpack.c.l.b16 %v1329
    %v1382 = vunpack.c.l.b16 %v1331
    %v1383 = vunpack.c.l.b16 %v1333
    %v1384 = vunpack.c.l.b16 %v1335
    %v1385 = vunpack.c.l.b16 %v1337
    %v1386 = vunpack.c.l.b16 %v1339
    %v1387 = vunpack.c.l.b16 %v1341
    %v1388 = vunpack.c.l.b16 %v1343
    %v1389 = vunpack.c.l.b16 %v1345
    %v1390 = vunpack.c.l.b16 %v1347
    %v1391 = vunpack.c.l.b16 %v1349
    %v1392 = vunpack.c.l.b16 %v1351
    %v1393 = vunpack.c.l.b16 %v1353
    %v1394 = vunpack.c.l.b16 %v1355
    %v1395 = vunpack.c.l.b16 %v1357
    %v1396 = vunpack.c.l.b16 %v1359
    %v1397 = vpack.c.b16 %v1382, %v1381
    %v1398 = vpack.c.b16 %v1384, %v1383
    %v1399 = vpack.c.b16 %v1386, %v1385
    %v1400 = vpack.c.b16 %v1388, %v1387
    %v1401 = vpack.c.b16 %v1390, %v1389
    %v1402 = vpack.c.b16 %v1392, %v1391
    %v1403 = vpack.c.b16 %v1394, %v1393
    %v1404 = vpack.c.b16 %v1396, %v1395
    %v1410 = vunpack.c.l.b16 %v1360
    %v1411 = vunpack.c.l.b16 %v1361
    %v1412 = vunpack.c.l.b16 %v1362
    %v1413 = vunpack.c.l.b16 %v1363
    %v1414 = vunpack.c.l.b16 %v1364
    %v1415 = vpack.c.b16 %v1411, %v1410
    %v1416 = vpack.c.b16 %v1413, %v1412
    %v1417 = vpack.c.b16 %v1414, %v1414
    %vm1420 = vcmask 293888
    %v1422 = vsel %vm1420, %v1397, 0
    %v1425 = vsel %vm1420, %v1398, 0
    %v1428 = vsel %vm1420, %v1399, 0
    %v1431 = vsel %vm1420, %v1400, 0
    %v1434 = vsel %vm1420, %v1401, 0
    %v1437 = vsel %vm1420, %v1402, 0
    %v1440 = vsel %vm1420, %v1403, 0
    %v1443 = vsel %vm1420, %v1404, 0
    %vm1445 = vcmask 1041408
    %v1447 = vsel %vm1445, %v1417, 0
    %1449 = vmatpush.bf16.msra.mxu0 0
    %1450 = vmatpush.bf16.msra.mxu0 0
    %1451 = vmatpush.bf16.msra.mxu0 0
    %1452 = vmatpush.bf16.msra.mxu0 0
    %1453 = vmatpush.bf16.msra.mxu0 0
    %1454 = vmatpush.bf16.msra.mxu0 %v1447
    %1455 = vmatpush.bf16.msra.mxu0 %v1416
    %1456 = vmatpush.bf16.msra.mxu0 %v1415
    %1457 = vmatmul.bf16.gmra.mxu0 %v1422
    %v1458 = vpop.f32.mrf.mxu0
    %v1459 = vadd.f32 0.0, %v1458
    %v1460 = vpop.f32.mrf.mxu0
    %v1461 = vadd.f32 0.0, %v1460
    %1462 = vmatmul.bf16.gmra.mxu0 %v1425
    %v1463 = vpop.f32.mrf.mxu0
    %v1464 = vadd.f32 0.0, %v1463
    %v1465 = vpop.f32.mrf.mxu0
    %v1466 = vadd.f32 0.0, %v1465
    %1467 = vmatmul.bf16.gmra.mxu0 %v1428
    %v1468 = vpop.f32.mrf.mxu0
    %v1469 = vadd.f32 0.0, %v1468
    %v1470 = vpop.f32.mrf.mxu0
    %v1471 = vadd.f32 0.0, %v1470
    %1472 = vmatmul.bf16.gmra.mxu0 %v1431
    %v1473 = vpop.f32.mrf.mxu0
    %v1474 = vadd.f32 0.0, %v1473
    %v1475 = vpop.f32.mrf.mxu0
    %v1476 = vadd.f32 0.0, %v1475
    %1477 = vmatmul.bf16.gmra.mxu0 %v1434
    %v1478 = vpop.f32.mrf.mxu0
    %v1479 = vadd.f32 0.0, %v1478
    %v1480 = vpop.f32.mrf.mxu0
    %v1481 = vadd.f32 0.0, %v1480
    %1482 = vmatmul.bf16.gmra.mxu0 %v1437
    %v1483 = vpop.f32.mrf.mxu0
    %v1484 = vadd.f32 0.0, %v1483
    %v1485 = vpop.f32.mrf.mxu0
    %v1486 = vadd.f32 0.0, %v1485
    %1487 = vmatmul.bf16.gmra.mxu0 %v1440
    %v1488 = vpop.f32.mrf.mxu0
    %v1489 = vadd.f32 0.0, %v1488
    %v1490 = vpop.f32.mrf.mxu0
    %v1491 = vadd.f32 0.0, %v1490
    %1492 = vmatmul.bf16.gmra.mxu0 %v1443
    %v1493 = vpop.f32.mrf.mxu0
    %v1494 = vadd.f32 0.0, %v1493
    %v1495 = vpop.f32.mrf.mxu0
    %v1496 = vadd.f32 0.0, %v1495
    %1497 = vdwg.mxu0
    %1498 = vst.msk [vmem:[#allocation2] sm:$0xff] %vm1179, %v1459
    %1499 = vst.msk [vmem:[#allocation2 + $0x8] sm:$0xff] %vm1179, %v1461
    %1500 = vst.msk [vmem:[#allocation2 + $0x10] sm:$0xff] %vm1179, %v1464
    %1501 = vst.msk [vmem:[#allocation2 + $0x18] sm:$0xff] %vm1179, %v1466
    %1502 = vst.msk [vmem:[#allocation2 + $0x20] sm:$0xff] %vm1179, %v1469
    %1503 = vst.msk [vmem:[#allocation2 + $0x28] sm:$0xff] %vm1179, %v1471
    %1504 = vst.msk [vmem:[#allocation2 + $0x30] sm:$0xff] %vm1179, %v1474
    %1505 = vst.msk [vmem:[#allocation2 + $0x38] sm:$0xff] %vm1179, %v1476
    %1506 = vst.msk [vmem:[#allocation2 + $0x40] sm:$0xff] %vm1179, %v1479
    %1507 = vst.msk [vmem:[#allocation2 + $0x48] sm:$0xff] %vm1179, %v1481
    %1508 = vst.msk [vmem:[#allocation2 + $0x50] sm:$0xff] %vm1179, %v1484
    %1509 = vst.msk [vmem:[#allocation2 + $0x58] sm:$0xff] %vm1179, %v1486
    %1510 = vst.msk [vmem:[#allocation2 + $0x60] sm:$0xff] %vm1179, %v1489
    %1511 = vst.msk [vmem:[#allocation2 + $0x68] sm:$0xff] %vm1179, %v1491
    %1512 = vst.msk [vmem:[#allocation2 + $0x70] sm:$0xff] %vm1179, %v1494
    %1513 = vst.msk [vmem:[#allocation2 + $0x78] sm:$0xff] %vm1179, %v1496
    // Predicated region
    $region26: #{tpu_custom_call.1} parent=1 // pred_check
      _
    $region27: #{tpu_custom_call.1} parent=1 // pred_check_branch
      %1515 = sbr.rel (0) target = $region29
    $region28: #{tpu_custom_call.1} parent=1 // pred_region
      %1517 = vsyncadd [#allocation3], 0
      %s1518 = sshll.u32 [#allocation2], 4
      %s1519 = int_to_ptr.vmem [resolvable:$true] %s1518
      %s1520 = sshll.u32 %s6, 4
      %s1521 = int_to_ptr.hbm [resolvable:$true] %s1520
      %1526 = dma.vmem_to_hbm [thread:$0]  %s1519, 2048, %s1521, [#allocation3], 128, 128, 8
    $region29: #{tpu_custom_call.1} parent=1 // pred_fallthru
      _
    // Predicated region
    $region30: #{tpu_custom_call.1} parent=1 // pred_check
      _
    $region31: #{tpu_custom_call.1} parent=1 // pred_check_branch
      %1528 = sbr.rel (0) target = $region33
    $region32: #{tpu_custom_call.1} parent=1 // pred_region
      %1530 = dma.done [#allocation3], 2048
    $region33: #{tpu_custom_call.1} parent=1 // pred_fallthru
      _
    %1531 = vsyncpa [#allocation3], 1

</llo_original>
